<compile_context>
chip_gen: v7x
topology: tpu7x:2x2x1
jax: 0.10.0
libtpu: 0.0.40
codegen_flags: <defaults>
</compile_context>

<pallas_src>
import functools
import math

import jax
import jax.numpy as jnp
from jax.experimental import pallas as pl
from jax.experimental.pallas import tpu as pltpu


# ----------------------------------------------------------------------------
# Glue (plain JAX): PyTorch align_corners=False source coordinates.
#   src = max((dst + 0.5) * s - 0.5, 0),  s = 1/scale_factor (PyTorch uses the
#   provided scale directly when given; falls back to in/out otherwise).
# ----------------------------------------------------------------------------
def _source_coords(out_size: int, in_size: int, scale):
    s = (1.0 / float(scale)) if (scale is not None and float(scale) > 0) else in_size / out_size
    dst = jnp.arange(out_size, dtype=jnp.float32)
    src = jnp.maximum((dst + 0.5) * s - 0.5, 0.0)
    i0 = jnp.minimum(jnp.floor(src).astype(jnp.int32), in_size - 1)
    i1 = jnp.minimum(i0 + 1, in_size - 1)
    w1 = src - i0.astype(jnp.float32)
    return i0, i1, w1


def _interp_matrix(in_size: int, out_size: int, scale, dtype):
    i0, i1, w1 = _source_coords(out_size, in_size, scale)
    w0 = 1.0 - w1
    rows = jnp.arange(out_size)
    mat = jnp.zeros((out_size, in_size), jnp.float32)
    mat = mat.at[rows, i0].add(w0)
    mat = mat.at[rows, i1].add(w1)      # i0 == i1 at the border -> weights still sum to 1
    return mat.astype(dtype)


def _output_size(in_size: int, scale) -> int:
    # PyTorch: floor(input_size * scale_factor), computed in double precision.
    return int(math.floor(float(in_size) * float(scale)))


# ----------------------------------------------------------------------------
# Hardware-aware sizing.
# ----------------------------------------------------------------------------
def _tpu_generation():
    """Returns (physical_vmem_bytes, multi_tensorcore). Conservative fallback."""
    vmem_bytes = 64 * 1024 * 1024
    try:
        vmem_bytes = int(pltpu.get_tpu_info().vmem_capacity_bytes)
    except Exception:
        pass
    # v5e/v6e: 128 MiB VMEM, 1 TC per chip.  v7x-class: 64 MiB VMEM, 2 TCs.
    multi_tc = vmem_bytes <= 64 * 1024 * 1024
    return vmem_bytes, multi_tc


def _block_footprint(b, hin, win, hout, wout, io_itemsize, weight_bufs):
    return (2 * b * hin * win * io_itemsize            # input slabs, double-buffered
            + 2 * b * hout * wout * io_itemsize        # output slabs, double-buffered
            + b * hin * wout * 4                       # f32 stage-1 intermediate
            + weight_bufs * (hout * hin + win * wout) * 4)   # Wh + Ww^T


def _choose_block_b(nc, hin, win, hout, wout, io_itemsize, budget_bytes,
                    multi_tc, weight_bufs):
    """How many (N,C) slabs to process per grid step."""
    if nc <= 1:
        return 1
    # Aim for ~512 sublane rows (M = B*Hin) on the flat stage-1 MXU matmul.
    b = min(nc, max(1, 512 // max(1, hin)))
    while b > 1 and _block_footprint(b, hin, win, hout, wout, io_itemsize,
                                     weight_bufs) > budget_bytes:
        b -= 1
    if multi_tc:
        # Two TensorCores: keep >= 4 grid steps so both cores stay pipelined.
        while b > 1 and pl.cdiv(nc, b) < min(4, nc):
            b -= 1

    def score(cand):
        g = pl.cdiv(nc, cand)
        return (nc % cand == 0,                               # no ragged last block
                (not multi_tc) or (g % 2 == 0) or (g >= 8),   # balanced across 2 TCs
                cand)                                         # otherwise: biggest
    return max(range(max(1, b // 2), b + 1), key=score)


# ----------------------------------------------------------------------------
# Kernel: B slabs per grid step.
#   wh_ref  : (Hout, Hin)    shared row-interp matrix (constant index_map), f32
#   wwT_ref : (Win, Wout)    shared col-interp matrix (transposed), f32
#   x_ref   : (B, Hin, Win)  B input slabs
#   o_ref   : (B*Hout, Wout) lane-dense flat block, or (B, Hout, Wout)
# ----------------------------------------------------------------------------
def _bilinear_kernel(wh_ref, wwT_ref, x_ref, o_ref, *,
                     block_b, hin, hout, flat_out, flat_stage1):
    wh = wh_ref[...]                      # (Hout, Hin)
    wwT = wwT_ref[...]                    # (Win,  Wout)

    def store(b, out_b):
        if flat_out:
            o_ref[pl.ds(b * hout, hout), :] = out_b.astype(o_ref.dtype)
        else:
            o_ref[b] = out_b.astype(o_ref.dtype)

    if flat_stage1:
        # Stage 1 (W-interp): ONE flat MXU matmul over all B slabs.  Collapsing
        # (B, Hin) -> B*Hin is layout-free (Win stays the lane dim; Hin is
        # sublane-aligned on this path).
        x_flat = x_ref[...].reshape(block_b * hin, -1).astype(jnp.float32)
        tmp = jnp.dot(x_flat, wwT, preferred_element_type=jnp.float32)   # (B*Hin, Wout)
        # Stage 2 (H-interp): per-slab matmul written straight to the output ref.
        for b in range(block_b):
            out_b = jnp.dot(wh, tmp[b * hin:(b + 1) * hin, :],
                            preferred_element_type=jnp.float32)          # (Hout, Wout)
            store(b, out_b)
    else:
        # Hin not sublane-aligned: keep everything per slab (slices stay at slab
        # boundaries, live ranges bounded per iteration, still no concatenate).
        for b in range(block_b):
            tmp_b = jnp.dot(x_ref[b].astype(jnp.float32), wwT,
                            preferred_element_type=jnp.float32)          # (Hin, Wout)
            store(b, jnp.dot(wh, tmp_b, preferred_element_type=jnp.float32))


def bilinear_upsample(x: jax.Array, scale_factor) -> jax.Array:
    """x: (N, C, H, W) -> (N, C, floor(H*s), floor(W*s)); bilinear, align_corners=False."""
    if isinstance(scale_factor, (list, tuple)):
        sh, sw = scale_factor
    else:
        sh = sw = scale_factor
    n, c, h, w = x.shape
    hout = _output_size(h, sh)
    wout = _output_size(w, sw)
    nc = n * c

    # Interp weights stay in f32: PyTorch uses fp32 opmath even for half/bf16 inputs.
    wh = _interp_matrix(h, hout, sh, jnp.float32)        # (Hout, Hin)
    wwT = _interp_matrix(w, wout, sw, jnp.float32).T     # (Win, Wout)

    vmem_bytes, multi_tc = _tpu_generation()
    if vmem_bytes >= 100 * 1024 * 1024:      # v5e / v6e: 128 MiB VMEM, single TC
        budget, vmem_limit = 40 * 1024 * 1024, 64 * 1024 * 1024
    else:                                    # v7x-class: 64 MiB VMEM, 2 TCs
        budget, vmem_limit = 20 * 1024 * 1024, 36 * 1024 * 1024

    # Single-buffer the constant-index weight inputs only when the saved VMEM
    # actually matters; small weights stay on plain double-buffered BlockSpecs.
    weight_bytes = (hout * h + w * wout) * 4
    single_buf_weights = weight_bytes > (1 << 20)
    weight_bufs = 1 if single_buf_weights else 2

    io_itemsize = jnp.dtype(x.dtype).itemsize
    block_b = _choose_block_b(nc, h, w, hout, wout, io_itemsize, budget,
                              multi_tc, weight_bufs)
    grid_len = pl.cdiv(nc, block_b)

    # Never let the scoped limit fall below the actual block footprint (large
    # spatial sizes), but keep headroom under physical VMEM.
    fp = _block_footprint(block_b, h, w, hout, wout, io_itemsize, weight_bufs)
    vmem_limit = int(min(max(vmem_limit, fp + 8 * 1024 * 1024),
                         vmem_bytes - 8 * 1024 * 1024))

    flat_out = (hout % 8 == 0)      # lane-dense (B*Hout, Wout) store, 8-aligned rows
    flat_stage1 = (h % 8 == 0)      # (B, Hin) -> B*Hin collapse is layout-free

    xf = x.reshape(nc, h, w)

    kernel = functools.partial(_bilinear_kernel, block_b=block_b, hin=h,
                               hout=hout, flat_out=flat_out,
                               flat_stage1=flat_stage1)

    w_kwargs = dict(pipeline_mode=pl.Buffered(1)) if single_buf_weights else {}
    in_specs = [
        pl.BlockSpec((hout, h), lambda i: (0, 0), **w_kwargs),   # Wh (constant, fetched once)
        pl.BlockSpec((w, wout), lambda i: (0, 0), **w_kwargs),   # Ww^T (constant)
        pl.BlockSpec((block_b, h, w), lambda i: (i, 0, 0)),      # B input slabs
    ]
    if flat_out:
        out_shape = jax.ShapeDtypeStruct((nc * hout, wout), x.dtype)
        out_spec = pl.BlockSpec((block_b * hout, wout), lambda i: (i, 0))
    else:
        out_shape = jax.ShapeDtypeStruct((nc, hout, wout), x.dtype)
        out_spec = pl.BlockSpec((block_b, hout, wout), lambda i: (i, 0, 0))

    out = pl.pallas_call(
        kernel,
        out_shape=out_shape,
        grid=(grid_len,),
        in_specs=in_specs,
        out_specs=out_spec,
        compiler_params=pltpu.CompilerParams(
            dimension_semantics=("parallel",),
            vmem_limit_bytes=vmem_limit),
    )(wh, wwT, xf)

    return out.reshape(n, c, hout, wout)


# ----------------------------------------------------------------------------
# Independent (gather-based) reference, same align_corners=False semantics.
# ----------------------------------------------------------------------------
def _ref_bilinear(x, scale_factor):
    if isinstance(scale_factor, (list, tuple)):
        sh, sw = scale_factor
    else:
        sh = sw = scale_factor
    n, c, h, w = x.shape
    hout, wout = _output_size(h, sh), _output_size(w, sw)

    h0, h1, wy = _source_coords(hout, h, sh)
    w0, w1, wx = _source_coords(wout, w, sw)
    xg = x.astype(jnp.float32)
    top = xg[:, :, h0][:, :, :, w0] * (1 - wx)[None, None, None, :] \
        + xg[:, :, h0][:, :, :, w1] * wx[None, None, None, :]
    bot = xg[:, :, h1][:, :, :, w0] * (1 - wx)[None, None, None, :] \
        + xg[:, :, h1][:, :, :, w1] * wx[None, None, None, :]
    out = top * (1 - wy)[None, None, :, None] + bot * wy[None, None, :, None]
    return out.astype(x.dtype)


if __name__ == "__main__":
    key = jax.random.PRNGKey(0)

    # Main case: aligned spatial dims -> flat MXU + lane-dense flat output path.
    x = jax.random.normal(key, (2, 4, 16, 16), dtype=jnp.float32)
    scale_factor = 2
    up = jax.jit(functools.partial(bilinear_upsample, scale_factor=scale_factor))
    y = up(x)
    jax.block_until_ready(y)
    y_ref = _ref_bilinear(x, scale_factor)
    assert y.shape == (2, 4, 32, 32), y.shape
    assert jnp.allclose(y, y_ref, atol=1e-5, rtol=1e-5), "mismatch vs reference (aligned case)"

    # Odd / unaligned case: exercises the per-slab (non-flat) path.
    x2 = jax.random.normal(jax.random.PRNGKey(1), (1, 3, 7, 9), dtype=jnp.float32)
    y2 = jax.jit(functools.partial(bilinear_upsample, scale_factor=1.5))(x2)
    jax.block_until_ready(y2)
    y2_ref = _ref_bilinear(x2, 1.5)
    assert y2.shape == y2_ref.shape, (y2.shape, y2_ref.shape)
    assert jnp.allclose(y2, y2_ref, atol=1e-5, rtol=1e-5), "mismatch vs reference (odd case)"

    print("KERNEL_OK")
</pallas_src>

<mosaic_0001>
module attributes {stable_mosaic.version = 11 : i64} {
  func.func private @main(%arg0: i32) attributes {dimension_semantics = [#tpu.dimension_semantics<core_parallel>], iteration_bounds = array<i64: 2>, tpu.core_type = #tpu.core_type<sc_scalar_subcore>, window_params = []} {
    return
  }
}

module attributes {stable_mosaic.version = 11 : i64} {
  func.func private @main(%arg0: i32) attributes {dimension_semantics = [#tpu.dimension_semantics<core_parallel>], iteration_bounds = array<i64: 2>, tpu.core_type = #tpu.core_type<sc_scalar_subcore>, window_params = []} {
    return
  }
}

module attributes {stable_mosaic.version = 11 : i64} {
  func.func @_bilinear_kernel(%arg0: i32, %arg1: memref<32x16xf32, #tpu.memory_space<vmem>>, %arg2: memref<16x32xf32, #tpu.memory_space<vmem>>, %arg3: memref<2x16x16xf32, #tpu.memory_space<vmem>>, %arg4: memref<64x32xf32, #tpu.memory_space<vmem>>) attributes {dimension_semantics = [#tpu.dimension_semantics<parallel>], iteration_bounds = array<i64: 4>, scalar_prefetch = 0 : i64, scratch_operands = 0 : i64, tpu.core_type = #tpu.core_type<tc>, window_params = [{pipeline_mode = #tpu.pipeline_mode<synchronous>, transform_indices = @transform_0, window_bounds = array<i64: 32, 16>}, {pipeline_mode = #tpu.pipeline_mode<synchronous>, transform_indices = @transform_1, window_bounds = array<i64: 16, 32>}, {transform_indices = @transform_2, window_bounds = array<i64: 2, 16, 16>}, {transform_indices = @transform_3, window_bounds = array<i64: 64, 32>}]} {
    %c0 = arith.constant 0 : index
    %c0_0 = arith.constant 0 : index
    %0 = vector.load %arg1[%c0, %c0_0] : memref<32x16xf32, #tpu.memory_space<vmem>>, vector<32x16xf32>
    %c0_1 = arith.constant 0 : index
    %c0_2 = arith.constant 0 : index
    %1 = vector.load %arg2[%c0_1, %c0_2] : memref<16x32xf32, #tpu.memory_space<vmem>>, vector<16x32xf32>
    %c0_3 = arith.constant 0 : index
    %c0_4 = arith.constant 0 : index
    %c0_5 = arith.constant 0 : index
    %2 = vector.load %arg3[%c0_3, %c0_4, %c0_5] : memref<2x16x16xf32, #tpu.memory_space<vmem>>, vector<2x16x16xf32>
    %3 = vector.shape_cast %2 : vector<2x16x16xf32> to vector<32x16xf32>
    %cst = arith.constant dense<0.000000e+00> : vector<32x32xf32>
    %4 = tpu.matmul %3, %1, %cst {dimension_numbers = #tpu.dot_dimension_numbers<[1], [0], [0], [1], [0, 0, 1, 1], [], []>} : vector<32x16xf32>, vector<16x32xf32>, vector<32x32xf32> -> vector<32x32xf32>
    %5 = vector.extract_strided_slice %4 {offsets = [0, 0], sizes = [16, 32], strides = [1, 1]} : vector<32x32xf32> to vector<16x32xf32>
    %cst_6 = arith.constant dense<0.000000e+00> : vector<32x32xf32>
    %6 = tpu.matmul %0, %5, %cst_6 {dimension_numbers = #tpu.dot_dimension_numbers<[1], [0], [0], [1], [0, 0, 1, 1], [], []>} : vector<32x16xf32>, vector<16x32xf32>, vector<32x32xf32> -> vector<32x32xf32>
    %c0_7 = arith.constant 0 : index
    %c0_8 = arith.constant 0 : index
    %7 = vector.load %arg4[%c0_7, %c0_8] : memref<64x32xf32, #tpu.memory_space<vmem>>, vector<32x32xf32>
    tpu.vector_store %arg4[%c0_7, %c0_8], %6 {strides = array<i32>} : memref<64x32xf32, #tpu.memory_space<vmem>>, vector<32x32xf32>,
    %8 = vector.extract_strided_slice %4 {offsets = [16, 0], sizes = [16, 32], strides = [1, 1]} : vector<32x32xf32> to vector<16x32xf32>
    %cst_9 = arith.constant dense<0.000000e+00> : vector<32x32xf32>
    %9 = tpu.matmul %0, %8, %cst_9 {dimension_numbers = #tpu.dot_dimension_numbers<[1], [0], [0], [1], [0, 0, 1, 1], [], []>} : vector<32x16xf32>, vector<16x32xf32>, vector<32x32xf32> -> vector<32x32xf32>
    %c32 = arith.constant 32 : index
    %c0_10 = arith.constant 0 : index
    %10 = vector.load %arg4[%c32, %c0_10] : memref<64x32xf32, #tpu.memory_space<vmem>>, vector<32x32xf32>
    tpu.vector_store %arg4[%c32, %c0_10], %9 {strides = array<i32>} : memref<64x32xf32, #tpu.memory_space<vmem>>, vector<32x32xf32>,
    return
  }
  func.func @transform_0(%arg0: i32) -> (i32, i32) {
    %c0_i32 = arith.constant 0 : i32
    %c0_i32_0 = arith.constant 0 : i32
    %c0_i32_1 = arith.constant 0 : i32
    return %c0_i32, %c0_i32_0 : i32, i32
  }
  func.func @transform_1(%arg0: i32) -> (i32, i32) {
    %c0_i32 = arith.constant 0 : i32
    %c0_i32_0 = arith.constant 0 : i32
    %c0_i32_1 = arith.constant 0 : i32
    return %c0_i32, %c0_i32_0 : i32, i32
  }
  func.func @transform_2(%arg0: i32) -> (i32, i32, i32) {
    %c0_i32 = arith.constant 0 : i32
    %c0_i32_0 = arith.constant 0 : i32
    %c0_i32_1 = arith.constant 0 : i32
    return %arg0, %c0_i32, %c0_i32_0 : i32, i32, i32
  }
  func.func @transform_3(%arg0: i32) -> (i32, i32) {
    %c0_i32 = arith.constant 0 : i32
    %c0_i32_0 = arith.constant 0 : i32
    return %arg0, %c0_i32 : i32, i32
  }
}

</mosaic_0001>

<llo_original>
// kernel: bilinear_upsample.1
$region0: #{bilinear_upsample.1}
  #allocation0 [shape = 'u32[]', space=smem, size = 0x4, offset = 0x4, fixed_abs, tag = 'smem constant byte address 0x4 - core index']
  #allocation1 [shape = 'u32[144,128]{1,0:T(1,128)}', space=vmem, size = 0x12000, scoped, tag = 'internal scratch']
  %s0 = inlined_call_operand.vmem [shape: f32[32,16], index: 0, kind: input, shape index: {}]
  %s1 = inlined_call_operand.vmem [shape: f32[16,32], index: 1, kind: input, shape index: {}]
  %s2 = inlined_call_operand.vmem [shape: f32[8,16,16], index: 2, kind: input, shape index: {}]
  %s3 = inlined_call_operand.hbm [shape: f32[256,32], index: 3, kind: output, shape index: {}]
  %s4 = sld [smem:[#allocation0]]
  $region45: #{bilinear_upsample.1} parent=0
    _
  %s6 = ssub.s32 1, %s4
  %s7 = scalar_select 0, %s6, %s4
  $region1: #{bilinear_upsample.1} parent=0
    #allocation2 [shape = 'u8[65536]{0}', space=vmem, size = 0x10000, scoped, tag = 'output window, operand 0']
    #allocation3 [shape = 's32[2]{0}', space=sflag, size = 0x8, scoped, tag = 'scoped memory for bilinear_upsample.1']
    %8 = vsyncpa [#allocation3], 0
    %s9 = scalar_lea.sflag [#allocation3], 1
    %10 = vsyncpa %s9, 0
    loop: start=0, step=1, limit=6
    $region2: #{bilinear_upsample.1} parent=1 // loop_pre_header
      _
    $region3: #{bilinear_upsample.1} parent=1 // loop_header
      %s12 = sphi 0, %s16
      %p13 = scmp.ge.s32.totalorder %s12, 6
      %s20 = sphi 0, %s20
      %s22 = sphi 0, %s20
      %s23 = sphi 0, %s22
      %s37 = sphi 0, %s23
      %s41 = sphi 0, %s41
      %s43 = sphi 0, %s41
      %s44 = sphi 0, %s43
      %s58 = sphi 0, %s44
      %s64 = sphi 0, %s66
      %s67 = sphi 0, %s64
      %s68 = sphi 0, %s67
      %s84 = sphi 0, %s68
      %s90 = sphi 0, %s92
      %s93 = sphi 0, %s90
      %s94 = sphi 0, %s93
      %s110 = sphi 0, %s94
    $region4: #{bilinear_upsample.1} parent=1 // loop_header_branch
      %15 = sbr.rel (%p13) target = $region8
    $region5: #{bilinear_upsample.1} parent=1 // loop_body
      %s17 = ssub.s32 %s12, 1
      %s18 = ssub.s32 %s12, 2
      %s19 = sadd.s32 %s12, 1
      %s21 = sadd.s32 %s20, 1
      %p24 = scmp.eq.s32.totalorder %s12, 3
      %p25 = scmp.ne.s32.totalorder %s20, %s22
      %p26 = scmp.eq.s32.totalorder %s12, 0
      %p27 = por %p25, %p26
      %p28 = scmp.ne.s32.totalorder %s20, %s22
      %p29 = scmp.eq.s32.totalorder %s17, 3
      %p30 = por %p28, %p29
      %p31 = scmp.ne.s32.totalorder %s22, %s23
      %p32 = scmp.eq.s32.totalorder %s17, 0
      %p33 = por %p31, %p32
      %p34 = scmp.ne.s32.totalorder %s22, %s23
      %p35 = scmp.eq.s32.totalorder %s18, 3
      %p36 = por %p34, %p35
      %p38 = scmp.ne.s32.totalorder %s23, %s37
      %p39 = scmp.eq.s32.totalorder %s18, 0
      %p40 = por %p38, %p39
      %s42 = sadd.s32 %s41, 1
      %p45 = scmp.eq.s32.totalorder %s12, 3
      %p46 = scmp.ne.s32.totalorder %s41, %s43
      %p47 = scmp.eq.s32.totalorder %s12, 0
      %p48 = por %p46, %p47
      %p49 = scmp.ne.s32.totalorder %s41, %s43
      %p50 = scmp.eq.s32.totalorder %s17, 3
      %p51 = por %p49, %p50
      %p52 = scmp.ne.s32.totalorder %s43, %s44
      %p53 = scmp.eq.s32.totalorder %s17, 0
      %p54 = por %p52, %p53
      %p55 = scmp.ne.s32.totalorder %s43, %s44
      %p56 = scmp.eq.s32.totalorder %s18, 3
      %p57 = por %p55, %p56
      %p59 = scmp.ne.s32.totalorder %s44, %s58
      %p60 = scmp.eq.s32.totalorder %s18, 0
      %p61 = por %p59, %p60
      %s62 = ssub.s32 %s12, %s19
      %p63 = scmp.eq.s32.totalorder %s62, 0
      %s65 = sadd.s32 %s64, 1
      %s66 = scalar_select %p63, %s64, %s65
      %p69 = pneg %p63
      %p70 = scmp.eq.s32.totalorder %s12, 3
      %p71 = por %p69, %p70
      %p72 = scmp.ne.s32.totalorder %s64, %s67
      %p73 = scmp.eq.s32.totalorder %s12, 0
      %p74 = por %p72, %p73
      %p75 = scmp.ne.s32.totalorder %s64, %s67
      %p76 = scmp.eq.s32.totalorder %s17, 3
      %p77 = por %p75, %p76
      %p78 = scmp.ne.s32.totalorder %s67, %s68
      %p79 = scmp.eq.s32.totalorder %s17, 0
      %p80 = por %p78, %p79
      %p81 = scmp.ne.s32.totalorder %s67, %s68
      %p82 = scmp.eq.s32.totalorder %s18, 3
      %p83 = por %p81, %p82
      %p85 = scmp.ne.s32.totalorder %s68, %s84
      %p86 = scmp.eq.s32.totalorder %s18, 0
      %p87 = por %p85, %p86
      %s88 = ssub.s32 %s12, %s19
      %p89 = scmp.eq.s32.totalorder %s88, 0
      %s91 = sadd.s32 %s90, 1
      %s92 = scalar_select %p89, %s90, %s91
      %p95 = pneg %p89
      %p96 = scmp.eq.s32.totalorder %s12, 3
      %p97 = por %p95, %p96
      %p98 = scmp.ne.s32.totalorder %s90, %s93
      %p99 = scmp.eq.s32.totalorder %s12, 0
      %p100 = por %p98, %p99
      %p101 = scmp.ne.s32.totalorder %s90, %s93
      %p102 = scmp.eq.s32.totalorder %s17, 3
      %p103 = por %p101, %p102
      %p104 = scmp.ne.s32.totalorder %s93, %s94
      %p105 = scmp.eq.s32.totalorder %s17, 0
      %p106 = por %p104, %p105
      %p107 = scmp.ne.s32.totalorder %s93, %s94
      %p108 = scmp.eq.s32.totalorder %s18, 3
      %p109 = por %p107, %p108
      %p111 = scmp.ne.s32.totalorder %s94, %s110
      %p112 = scmp.eq.s32.totalorder %s18, 0
      %p113 = por %p111, %p112
      %p114 = scmp.le.s32.totalorder 1, %s12
      %p115 = scmp.lt.s32.totalorder %s12, 5
      %p116 = pnand %p114, %p115
      %p117 = pneg %p116
      // Predicated region
      $region9: #{bilinear_upsample.1} parent=5 // pred_check
        _
      $region10: #{bilinear_upsample.1} parent=5 // pred_check_branch
        %119 = sbr.rel (%p116) target = $region12
      $region11: #{bilinear_upsample.1} parent=5 // pred_region
        %s120 = ssub.s32 %s12, 1
        // Predicated region
        $region13: #{bilinear_upsample.1} parent=11 // pred_check
          %p121 = pneg %p33
        $region14: #{bilinear_upsample.1} parent=11 // pred_check_branch
          %123 = sbr.rel (%p121) target = $region16
        $region15: #{bilinear_upsample.1} parent=11 // pred_region
          _
        $region16: #{bilinear_upsample.1} parent=11 // pred_fallthru
          _
        // Predicated region
        $region17: #{bilinear_upsample.1} parent=11 // pred_check
          %p124 = pneg %p54
        $region18: #{bilinear_upsample.1} parent=11 // pred_check_branch
          %126 = sbr.rel (%p124) target = $region20
        $region19: #{bilinear_upsample.1} parent=11 // pred_region
          _
        $region20: #{bilinear_upsample.1} parent=11 // pred_fallthru
          _
      $region12: #{bilinear_upsample.1} parent=5 // pred_fallthru
        _
      %p127 = scmp.lt.s32.totalorder %s12, 4
      // Predicated region
      $region21: #{bilinear_upsample.1} parent=5 // pred_check
        %p128 = pneg %p127
      $region22: #{bilinear_upsample.1} parent=5 // pred_check_branch
        %130 = sbr.rel (%p128) target = $region24
      $region23: #{bilinear_upsample.1} parent=5 // pred_region
        // Predicated region
        $region25: #{bilinear_upsample.1} parent=23 // pred_check
          %p131 = pneg %p74
        $region26: #{bilinear_upsample.1} parent=23 // pred_check_branch
          %133 = sbr.rel (%p131) target = $region28
        $region27: #{bilinear_upsample.1} parent=23 // pred_region
          %s134 = smul.u32 2, %s12
          %p135 = scmp.lt.s32.totalorder %s134, 7
          %s136 = scalar_select %p135, %s134, 7
          %s137 = smul.addr %s136, 2
          %s138 = smul.addr %s137, 8
          %s139 = scalar_lea.vmem %s2, %s138
          %s140 = smul.u32 2, %s12
        $region28: #{bilinear_upsample.1} parent=23 // pred_fallthru
          _
      $region24: #{bilinear_upsample.1} parent=5 // pred_fallthru
        _
      %p141 = scmp.le.s32.totalorder 1, %s12
      %p142 = scmp.lt.s32.totalorder %s12, 5
      %p143 = pnand %p141, %p142
      %p144 = pneg %p143
      // Predicated region
      $region29: #{bilinear_upsample.1} parent=5 // pred_check
        _
      $region30: #{bilinear_upsample.1} parent=5 // pred_check_branch
        %146 = sbr.rel (%p143) target = $region32
      $region31: #{bilinear_upsample.1} parent=5 // pred_region
        %s147 = ssub.s32 %s12, 1
        %p148 = pneg %p33
        %p149 = pneg %p30
        %p150 = pneg %p54
        %p151 = pneg %p51
        %s152 = smul.u32 2, %s17
        %p153 = scmp.lt.s32.totalorder %s152, 7
        %s154 = scalar_select %p153, %s152, 7
        %s155 = smul.addr %s154, 2
        %s156 = smul.addr %s155, 8
        %s157 = scalar_lea.vmem %s2, %s156
        %p158 = pneg %p80
        %p159 = pneg %p77
        %p160 = pneg %p106
        %p161 = pneg %p103
        %s162 = sand.u32 %s93, 1
        %s163 = scalar_lea.sflag [#allocation3], %s162
        %s164 = sand.u32 %s93, 1
        %s165 = smul.addr %s164, 64
        %s166 = scalar_lea.vmem [#allocation2], %s165
        %s167 = smul.u32 2, %s17
        %p168 = scmp.lt.s32.totalorder %s167, 7
        %s169 = scalar_select %p168, %s167, 7
        %s170 = smul.addr %s169, 2
        %s171 = smul.addr %s170, 8
        %s172 = scalar_lea.vmem %s2, %s171
        %s173 = smul.u32 2, %s17
        %s174 = smul.u32 8, %s17
        %v175 = vld [vmem:[%s0] sm:$0xff]
        %v176 = vld [vmem:[%s0 + $0x8] sm:$0xff]
        %v177 = vld [vmem:[%s0 + $0x10] sm:$0xff]
        %v178 = vld [vmem:[%s0 + $0x18] sm:$0xff]
        %v179 = vld [vmem:[%s1] sm:$0xff]
        %v180 = vld [vmem:[%s1 + $0x8] sm:$0xff]
        %v181 = vld [vmem:[%s172] sm:$0xff]
        %v182 = vld [vmem:[%s172 + $0x8] sm:$0xff]
        %v183 = vld [vmem:[%s172 + $0x10] sm:$0xff]
        %v184 = vld [vmem:[%s172 + $0x18] sm:$0xff]
        %vm185 = vcmask 130048
        %v187 = vsel %vm185, %v181, 0
        %v190 = vsel %vm185, %v182, 0
        %v193 = vsel %vm185, %v183, 0
        %v196 = vsel %vm185, %v184, 0
        %198 = vmatprep.subr.mxu0 0.0
        %199 = vmatpush1.msra.mxu0 %v179
        %200 = vmatprep.subr.mxu0 0.0
        %201 = vmatpush1.msra.mxu0 %v180
        %202 = vmatprep.subr.mxu0 0.0
        %203 = vmatpush1.msra.mxu0 0.0
        %204 = vmatprep.subr.mxu0 0.0
        %205 = vmatpush1.msra.mxu0 0.0
        %206 = vmatprep.subr.mxu0 0.0
        %207 = vmatpush1.msra.mxu0 0.0
        %208 = vmatprep.subr.mxu0 0.0
        %209 = vmatpush1.msra.mxu0 0.0
        %210 = vmatprep.subr.mxu0 0.0
        %211 = vmatpush1.msra.mxu0 0.0
        %212 = vmatprep.subr.mxu0 0.0
        %213 = vmatpush1.msra.mxu0 0.0
        %214 = vmatprep.subr.mxu0 0.0
        %215 = vmatpush1.msra.mxu0 0.0
        %216 = vmatprep.subr.mxu0 0.0
        %217 = vmatpush1.msra.mxu0 0.0
        %218 = vmatprep.subr.mxu0 0.0
        %219 = vmatpush1.msra.mxu0 0.0
        %220 = vmatprep.subr.mxu0 0.0
        %221 = vmatpush1.msra.mxu0 0.0
        %222 = vmatprep.subr.mxu0 0.0
        %223 = vmatpush1.msra.mxu0 0.0
        %224 = vmatprep.subr.mxu0 0.0
        %225 = vmatpush1.msra.mxu0 0.0
        %226 = vmatprep.subr.mxu0 0.0
        %227 = vmatpush1.msra.mxu0 0.0
        %228 = vmatprep.subr.mxu0 0.0
        %229 = vmatpush1.msra.mxu0 0.0
        %230 = vmatprep.subr.mxu0 0.0
        %231 = vmatpush1.msra.mxu0 0.0
        %232 = vmatprep.subr.mxu0 0.0
        %233 = vmatpush1.msra.mxu0 0.0
        %234 = vmatprep.subr.mxu0 0.0
        %235 = vmatpush1.msra.mxu0 0.0
        %236 = vmatprep.subr.mxu0 0.0
        %237 = vmatpush1.msra.mxu0 0.0
        %238 = vmatprep.subr.mxu0 0.0
        %239 = vmatpush1.msra.mxu0 0.0
        %240 = vmatprep.subr.mxu0 0.0
        %241 = vmatpush1.msra.mxu0 0.0
        %242 = vmatprep.subr.mxu0 0.0
        %243 = vmatpush1.msra.mxu0 0.0
        %244 = vmatprep.subr.mxu0 0.0
        %245 = vmatpush1.msra.mxu0 0.0
        %246 = vmatprep.subr.mxu0 0.0
        %247 = vmatpush1.msra.mxu0 0.0
        %248 = vmatprep.subr.mxu0 0.0
        %249 = vmatpush1.msra.mxu0 0.0
        %250 = vmatprep.subr.mxu0 0.0
        %251 = vmatpush1.msra.mxu0 0.0
        %252 = vmatprep.subr.mxu0 0.0
        %253 = vmatpush1.msra.mxu0 0.0
        %254 = vmatprep.subr.mxu0 0.0
        %255 = vmatpush1.msra.mxu0 0.0
        %256 = vmatprep.subr.mxu0 0.0
        %257 = vmatpush1.msra.mxu0 0.0
        %258 = vmatprep.subr.mxu0 0.0
        %259 = vmatpush1.msra.mxu0 0.0
        %260 = vmatprep.subr.mxu0 0.0
        %261 = vmatpush1.msra.mxu0 0.0
        %262 = vmatprep.mubr.f32.mxu0 0.0
        %263 = vmatmul.mubr.f32.gmra.mrb[0].mxu0 %v187
        %v264 = vpop.f32.mrb[0].mxu0
        %v265 = vadd.f32 0.0, %v264
        %v266 = vpop.f32.mrb[0].mxu0
        %267 = vmatprep.mubr.f32.mxu0 0.0
        %268 = vmatmul.mubr.f32.gmra.mrb[0].mxu0 %v190
        %v269 = vpop.f32.mrb[0].mxu0
        %v270 = vadd.f32 0.0, %v269
        %v271 = vpop.f32.mrb[0].mxu0
        %272 = vmatprep.mubr.f32.mxu0 0.0
        %273 = vmatmul.mubr.f32.gmra.mrb[0].mxu0 %v193
        %v274 = vpop.f32.mrb[0].mxu0
        %v275 = vadd.f32 0.0, %v274
        %v276 = vpop.f32.mrb[0].mxu0
        %277 = vmatprep.mubr.f32.mxu0 0.0
        %278 = vmatmul.mubr.f32.gmra.mrb[0].mxu0 %v196
        %v279 = vpop.f32.mrb[0].mxu0
        %v280 = vadd.f32 0.0, %v279
        %v281 = vpop.f32.mrb[0].mxu0
        %282 = vdwg.mxu0
        %v284 = vsel %vm185, %v175, 0
        %v287 = vsel %vm185, %v176, 0
        %v290 = vsel %vm185, %v177, 0
        %v293 = vsel %vm185, %v178, 0
        %295 = vmatprep.subr.mxu0 0.0
        %296 = vmatpush1.msra.mxu0 %v265
        %297 = vmatprep.subr.mxu0 0.0
        %298 = vmatpush1.msra.mxu0 %v270
        %299 = vmatprep.subr.mxu0 0.0
        %300 = vmatpush1.msra.mxu0 0.0
        %301 = vmatprep.subr.mxu0 0.0
        %302 = vmatpush1.msra.mxu0 0.0
        %303 = vmatprep.subr.mxu0 0.0
        %304 = vmatpush1.msra.mxu0 0.0
        %305 = vmatprep.subr.mxu0 0.0
        %306 = vmatpush1.msra.mxu0 0.0
        %307 = vmatprep.subr.mxu0 0.0
        %308 = vmatpush1.msra.mxu0 0.0
        %309 = vmatprep.subr.mxu0 0.0
        %310 = vmatpush1.msra.mxu0 0.0
        %311 = vmatprep.subr.mxu0 0.0
        %312 = vmatpush1.msra.mxu0 0.0
        %313 = vmatprep.subr.mxu0 0.0
        %314 = vmatpush1.msra.mxu0 0.0
        %315 = vmatprep.subr.mxu0 0.0
        %316 = vmatpush1.msra.mxu0 0.0
        %317 = vmatprep.subr.mxu0 0.0
        %318 = vmatpush1.msra.mxu0 0.0
        %319 = vmatprep.subr.mxu0 0.0
        %320 = vmatpush1.msra.mxu0 0.0
        %321 = vmatprep.subr.mxu0 0.0
        %322 = vmatpush1.msra.mxu0 0.0
        %323 = vmatprep.subr.mxu0 0.0
        %324 = vmatpush1.msra.mxu0 0.0
        %325 = vmatprep.subr.mxu0 0.0
        %326 = vmatpush1.msra.mxu0 0.0
        %327 = vmatprep.subr.mxu0 0.0
        %328 = vmatpush1.msra.mxu0 0.0
        %329 = vmatprep.subr.mxu0 0.0
        %330 = vmatpush1.msra.mxu0 0.0
        %331 = vmatprep.subr.mxu0 0.0
        %332 = vmatpush1.msra.mxu0 0.0
        %333 = vmatprep.subr.mxu0 0.0
        %334 = vmatpush1.msra.mxu0 0.0
        %335 = vmatprep.subr.mxu0 0.0
        %336 = vmatpush1.msra.mxu0 0.0
        %337 = vmatprep.subr.mxu0 0.0
        %338 = vmatpush1.msra.mxu0 0.0
        %339 = vmatprep.subr.mxu0 0.0
        %340 = vmatpush1.msra.mxu0 0.0
        %341 = vmatprep.subr.mxu0 0.0
        %342 = vmatpush1.msra.mxu0 0.0
        %343 = vmatprep.subr.mxu0 0.0
        %344 = vmatpush1.msra.mxu0 0.0
        %345 = vmatprep.subr.mxu0 0.0
        %346 = vmatpush1.msra.mxu0 0.0
        %347 = vmatprep.subr.mxu0 0.0
        %348 = vmatpush1.msra.mxu0 0.0
        %349 = vmatprep.subr.mxu0 0.0
        %350 = vmatpush1.msra.mxu0 0.0
        %351 = vmatprep.subr.mxu0 0.0
        %352 = vmatpush1.msra.mxu0 0.0
        %353 = vmatprep.subr.mxu0 0.0
        %354 = vmatpush1.msra.mxu0 0.0
        %355 = vmatprep.subr.mxu0 0.0
        %356 = vmatpush1.msra.mxu0 0.0
        %357 = vmatprep.subr.mxu0 0.0
        %358 = vmatpush1.msra.mxu0 0.0
        %359 = vmatprep.mubr.f32.mxu0 0.0
        %360 = vmatmul.mubr.f32.gmra.mrb[0].mxu0 %v284
        %v361 = vpop.f32.mrb[0].mxu0
        %v362 = vadd.f32 0.0, %v361
        %v363 = vpop.f32.mrb[0].mxu0
        %364 = vmatprep.mubr.f32.mxu0 0.0
        %365 = vmatmul.mubr.f32.gmra.mrb[0].mxu0 %v287
        %v366 = vpop.f32.mrb[0].mxu0
        %v367 = vadd.f32 0.0, %v366
        %v368 = vpop.f32.mrb[0].mxu0
        %369 = vmatprep.mubr.f32.mxu0 0.0
        %370 = vmatmul.mubr.f32.gmra.mrb[0].mxu0 %v290
        %v371 = vpop.f32.mrb[0].mxu0
        %v372 = vadd.f32 0.0, %v371
        %v373 = vpop.f32.mrb[0].mxu0
        %374 = vmatprep.mubr.f32.mxu0 0.0
        %375 = vmatmul.mubr.f32.gmra.mrb[0].mxu0 %v293
        %v376 = vpop.f32.mrb[0].mxu0
        %v377 = vadd.f32 0.0, %v376
        %v378 = vpop.f32.mrb[0].mxu0
        %379 = vdwg.mxu0
        %vm380 = vcmask 261120
        %381 = vst.msk [vmem:[%s166] sm:$0xff] %vm380, %v362
        %382 = vst.msk [vmem:[%s166 + $0x8] sm:$0xff] %vm380, %v367
        %383 = vst.msk [vmem:[%s166 + $0x10] sm:$0xff] %vm380, %v372
        %384 = vst.msk [vmem:[%s166 + $0x18] sm:$0xff] %vm380, %v377
        %385 = vmatprep.subr.mxu0 0.0
        %386 = vmatpush1.msra.mxu0 %v275
        %387 = vmatprep.subr.mxu0 0.0
        %388 = vmatpush1.msra.mxu0 %v280
        %389 = vmatprep.subr.mxu0 0.0
        %390 = vmatpush1.msra.mxu0 0.0
        %391 = vmatprep.subr.mxu0 0.0
        %392 = vmatpush1.msra.mxu0 0.0
        %393 = vmatprep.subr.mxu0 0.0
        %394 = vmatpush1.msra.mxu0 0.0
        %395 = vmatprep.subr.mxu0 0.0
        %396 = vmatpush1.msra.mxu0 0.0
        %397 = vmatprep.subr.mxu0 0.0
        %398 = vmatpush1.msra.mxu0 0.0
        %399 = vmatprep.subr.mxu0 0.0
        %400 = vmatpush1.msra.mxu0 0.0
        %401 = vmatprep.subr.mxu0 0.0
        %402 = vmatpush1.msra.mxu0 0.0
        %403 = vmatprep.subr.mxu0 0.0
        %404 = vmatpush1.msra.mxu0 0.0
        %405 = vmatprep.subr.mxu0 0.0
        %406 = vmatpush1.msra.mxu0 0.0
        %407 = vmatprep.subr.mxu0 0.0
        %408 = vmatpush1.msra.mxu0 0.0
        %409 = vmatprep.subr.mxu0 0.0
        %410 = vmatpush1.msra.mxu0 0.0
        %411 = vmatprep.subr.mxu0 0.0
        %412 = vmatpush1.msra.mxu0 0.0
        %413 = vmatprep.subr.mxu0 0.0
        %414 = vmatpush1.msra.mxu0 0.0
        %415 = vmatprep.subr.mxu0 0.0
        %416 = vmatpush1.msra.mxu0 0.0
        %417 = vmatprep.subr.mxu0 0.0
        %418 = vmatpush1.msra.mxu0 0.0
        %419 = vmatprep.subr.mxu0 0.0
        %420 = vmatpush1.msra.mxu0 0.0
        %421 = vmatprep.subr.mxu0 0.0
        %422 = vmatpush1.msra.mxu0 0.0
        %423 = vmatprep.subr.mxu0 0.0
        %424 = vmatpush1.msra.mxu0 0.0
        %425 = vmatprep.subr.mxu0 0.0
        %426 = vmatpush1.msra.mxu0 0.0
        %427 = vmatprep.subr.mxu0 0.0
        %428 = vmatpush1.msra.mxu0 0.0
        %429 = vmatprep.subr.mxu0 0.0
        %430 = vmatpush1.msra.mxu0 0.0
        %431 = vmatprep.subr.mxu0 0.0
        %432 = vmatpush1.msra.mxu0 0.0
        %433 = vmatprep.subr.mxu0 0.0
        %434 = vmatpush1.msra.mxu0 0.0
        %435 = vmatprep.subr.mxu0 0.0
        %436 = vmatpush1.msra.mxu0 0.0
        %437 = vmatprep.subr.mxu0 0.0
        %438 = vmatpush1.msra.mxu0 0.0
        %439 = vmatprep.subr.mxu0 0.0
        %440 = vmatpush1.msra.mxu0 0.0
        %441 = vmatprep.subr.mxu0 0.0
        %442 = vmatpush1.msra.mxu0 0.0
        %443 = vmatprep.subr.mxu0 0.0
        %444 = vmatpush1.msra.mxu0 0.0
        %445 = vmatprep.subr.mxu0 0.0
        %446 = vmatpush1.msra.mxu0 0.0
        %447 = vmatprep.subr.mxu0 0.0
        %448 = vmatpush1.msra.mxu0 0.0
        %449 = vmatprep.mubr.f32.mxu0 0.0
        %450 = vmatmul.mubr.f32.gmra.mrb[0].mxu0 %v284
        %v451 = vpop.f32.mrb[0].mxu0
        %v452 = vadd.f32 0.0, %v451
        %v453 = vpop.f32.mrb[0].mxu0
        %454 = vmatprep.mubr.f32.mxu0 0.0
        %455 = vmatmul.mubr.f32.gmra.mrb[0].mxu0 %v287
        %v456 = vpop.f32.mrb[0].mxu0
        %v457 = vadd.f32 0.0, %v456
        %v458 = vpop.f32.mrb[0].mxu0
        %459 = vmatprep.mubr.f32.mxu0 0.0
        %460 = vmatmul.mubr.f32.gmra.mrb[0].mxu0 %v290
        %v461 = vpop.f32.mrb[0].mxu0
        %v462 = vadd.f32 0.0, %v461
        %v463 = vpop.f32.mrb[0].mxu0
        %464 = vmatprep.mubr.f32.mxu0 0.0
        %465 = vmatmul.mubr.f32.gmra.mrb[0].mxu0 %v293
        %v466 = vpop.f32.mrb[0].mxu0
        %v467 = vadd.f32 0.0, %v466
        %v468 = vpop.f32.mrb[0].mxu0
        %469 = vdwg.mxu0
        %470 = vst.msk [vmem:[%s166 + $0x20] sm:$0xff] %vm380, %v452
        %471 = vst.msk [vmem:[%s166 + $0x28] sm:$0xff] %vm380, %v457
        %472 = vst.msk [vmem:[%s166 + $0x30] sm:$0xff] %vm380, %v462
        %473 = vst.msk [vmem:[%s166 + $0x38] sm:$0xff] %vm380, %v467
        %s474 = sand.u32 %s93, 1
        %s475 = scalar_lea.sflag [#allocation3], %s474
        %s476 = sand.u32 %s93, 1
        %s477 = smul.addr %s476, 64
        %s478 = scalar_lea.vmem [#allocation2], %s477
        // Predicated region
        $region33: #{bilinear_upsample.1} parent=31 // pred_check
          %p479 = pneg %p103
        $region34: #{bilinear_upsample.1} parent=31 // pred_check_branch
          %481 = sbr.rel (%p479) target = $region36
        $region35: #{bilinear_upsample.1} parent=31 // pred_region
          %s482 = smul.u32 8, %s17
          %s484 = ssub.s32 1024, 1024
          %485 = vsyncadd %s475, %s484
          %s486 = smul.addr %s482, 128
          %s487 = scalar_lea.hbm %s3, %s486
          %s488 = sshll.u32 %s478, 4
          %s489 = int_to_ptr.vmem [resolvable:$true] %s488
          %494 = dma.vmem_to_hbm [thread:$0]  %s489, 1024, %s487, %s475, 128, 128, 8
        $region36: #{bilinear_upsample.1} parent=31 // pred_fallthru
          _
      $region32: #{bilinear_upsample.1} parent=5 // pred_fallthru
        _
      %p495 = scmp.le.s32.totalorder 2, %s12
      // Predicated region
      $region37: #{bilinear_upsample.1} parent=5 // pred_check
        %p496 = pneg %p495
      $region38: #{bilinear_upsample.1} parent=5 // pred_check_branch
        %498 = sbr.rel (%p496) target = $region40
      $region39: #{bilinear_upsample.1} parent=5 // pred_region
        %s499 = ssub.s32 %s12, 2
        // Predicated region
        $region41: #{bilinear_upsample.1} parent=39 // pred_check
          %p500 = pneg %p109
        $region42: #{bilinear_upsample.1} parent=39 // pred_check_branch
          %502 = sbr.rel (%p500) target = $region44
        $region43: #{bilinear_upsample.1} parent=39 // pred_region
          %s503 = sand.u32 %s94, 1
          %s504 = scalar_lea.sflag [#allocation3], %s503
          %s505 = sand.u32 %s94, 1
          %s506 = smul.addr %s505, 64
          %s507 = scalar_lea.vmem [#allocation2], %s506
          %508 = dma.done %s504, 1024
        $region44: #{bilinear_upsample.1} parent=39 // pred_fallthru
          _
      $region40: #{bilinear_upsample.1} parent=5 // pred_fallthru
        _
    $region6: #{bilinear_upsample.1} parent=1 // loop_footer
      %s16 = sadd.s32 1, %s12
    $region7: #{bilinear_upsample.1} parent=1 // loop_footer_branch
      %11 = sbr.rel target = $region3
    $region8: #{bilinear_upsample.1} parent=1 // loop_exit
      _
    %509 = vsyncpa [#allocation3], 1
    %s510 = scalar_lea.sflag [#allocation3], 1
    %511 = vsyncpa %s510, 1

</llo_original>
